<compile_context>
chip_gen: v6e
topology: v6e:2x2x1
jax: 0.10.0
libtpu: 0.0.40
codegen_flags: <defaults>
</compile_context>

<pallas_src>
import functools

import jax
import jax.numpy as jnp
from jax.experimental import pallas as pl
from jax.experimental.pallas import tpu as pltpu


def _inverse_ce_kernel(logits_ref, labels_ref, weights_ref, out_ref):
    # (TILE_N, C) block of logits; upcast in-kernel (cheap VPU op).
    logits = logits_ref[...].astype(jnp.float32)
    labels = labels_ref[...]                            # (TILE_N, 1) int32
    w = weights_ref[...].astype(jnp.float32)            # (TILE_N, 1)

    tn, c = logits.shape

    # Gather-free label selection: one-hot mask along the class (lane) axis.
    col_ids = jax.lax.broadcasted_iota(jnp.int32, (tn, c), 1)
    label_mask = col_ids == labels                      # (TILE_N, C)

    # Numerically stable log-softmax statistics along the class axis.
    row_max = jnp.max(logits, axis=1, keepdims=True)    # (TILE_N, 1)
    shifted = logits - row_max                          # (TILE_N, C)
    sum_exp = jnp.sum(jnp.exp(shifted), axis=1, keepdims=True)
    log_sum_exp = jnp.log(sum_exp)                      # (TILE_N, 1)

    # shifted logit at the label column, via a single masked row-reduction.
    shifted_label = jnp.sum(
        jnp.where(label_mask, shifted, 0.0), axis=1, keepdims=True
    )                                                   # (TILE_N, 1)

    log_p_label = shifted_label - log_sum_exp           # (TILE_N, 1)
    p_label = jnp.exp(log_p_label)                      # exact, per-row EUP op

    loss_correct = -log_p_label
    loss_incorrect = -jnp.log(1.0 - p_label + 1e-12)

    out_ref[...] = w * loss_correct + (1.0 - w) * loss_incorrect


def _choose_tile_n(n, c, itemsize):
    """Rows per grid step: ~4 MiB logits block (<= ~8 MiB double-buffered),
    safely inside the default scoped-VMEM limit on v5e/v6e/v7x."""
    budget_bytes = 4 * 1024 * 1024
    t = budget_bytes // max(1, c * itemsize)
    t = max(8, min(int(t), 1024))
    t = (t // 8) * 8
    n_rows = ((n + 7) // 8) * 8
    return min(t, n_rows)


@functools.partial(jax.jit, static_argnames=())
def inverse_cross_entropy_loss(logits, labels, weights):
    """logits: (N, C) float, labels: (N,) int, weights: (N,) float -> (N,) f32."""
    n, c = logits.shape
    tile_n = _choose_tile_n(n, c, jnp.dtype(logits.dtype).itemsize)

    num_tiles = pl.cdiv(n, tile_n)
    n_pad = num_tiles * tile_n

    labels2d = labels.astype(jnp.int32).reshape(n, 1)
    weights2d = weights.reshape(n, 1)

    if n_pad != n:
        pad = n_pad - n
        # Zero-padded rows give a finite uniform softmax (no inf/NaN); the
        # padded outputs are sliced off below.
        logits_p = jnp.pad(logits, ((0, pad), (0, 0)))
        labels_p = jnp.pad(labels2d, ((0, pad), (0, 0)))
        weights_p = jnp.pad(weights2d, ((0, pad), (0, 0)))
    else:
        logits_p, labels_p, weights_p = logits, labels2d, weights2d

    out = pl.pallas_call(
        _inverse_ce_kernel,
        out_shape=jax.ShapeDtypeStruct((n_pad, 1), jnp.float32),
        grid=(num_tiles,),
        in_specs=[
            pl.BlockSpec((tile_n, c), lambda i: (i, 0)),
            pl.BlockSpec((tile_n, 1), lambda i: (i, 0)),
            pl.BlockSpec((tile_n, 1), lambda i: (i, 0)),
        ],
        out_specs=pl.BlockSpec((tile_n, 1), lambda i: (i, 0)),
        compiler_params=pltpu.CompilerParams(
            dimension_semantics=("parallel",),
        ),
    )(logits_p, labels_p, weights_p)

    return out.reshape(n_pad)[:n]


if __name__ == "__main__":
    key = jax.random.PRNGKey(0)
    k1, k2, k3 = jax.random.split(key, 3)

    N, C = 8, 32  # batch, num_classes (small demo shapes)
    logits = jax.random.normal(k1, (N, C), dtype=jnp.float32)
    labels = jax.random.randint(k2, (N,), 0, C, dtype=jnp.int32)
    weights = jax.random.uniform(k3, (N,), dtype=jnp.float32)

    loss = inverse_cross_entropy_loss(logits, labels, weights)
    jax.block_until_ready(loss)

    # Pure-JAX reference (mirrors the PyTorch forward exactly).
    log_probs = jax.nn.log_softmax(logits, axis=1)
    probs = jax.nn.softmax(logits, axis=1)
    idx = jnp.arange(N)
    loss_correct_ref = -log_probs[idx, labels]
    loss_incorrect_ref = -jnp.log(1.0 - probs[idx, labels] + 1e-12)
    ref = weights * loss_correct_ref + (1.0 - weights) * loss_incorrect_ref

    assert jnp.allclose(loss, ref, atol=1e-5, rtol=1e-5), (loss, ref)
    print("KERNEL_OK")
</pallas_src>

<mosaic_0001>
module attributes {stable_mosaic.version = 11 : i64} {
  func.func @_inverse_ce_kernel(%arg0: i32, %arg1: memref<8x32xf32, #tpu.memory_space<vmem>>, %arg2: memref<8x1xi32, #tpu.memory_space<vmem>>, %arg3: memref<8x1xf32, #tpu.memory_space<vmem>>, %arg4: memref<8x1xf32, #tpu.memory_space<vmem>>) attributes {dimension_semantics = [#tpu.dimension_semantics<parallel>], iteration_bounds = array<i64: 1>, scalar_prefetch = 0 : i64, scratch_operands = 0 : i64, tpu.core_type = #tpu.core_type<tc>, window_params = [{transform_indices = @transform_0, window_bounds = array<i64: 8, 32>}, {transform_indices = @transform_1, window_bounds = array<i64: 8, 1>}, {transform_indices = @transform_2, window_bounds = array<i64: 8, 1>}, {transform_indices = @transform_3, window_bounds = array<i64: 8, 1>}]} {
    %c0 = arith.constant 0 : index
    %c0_0 = arith.constant 0 : index
    %0 = vector.load %arg1[%c0, %c0_0] : memref<8x32xf32, #tpu.memory_space<vmem>>, vector<8x32xf32>
    %c0_1 = arith.constant 0 : index
    %c0_2 = arith.constant 0 : index
    %1 = vector.load %arg2[%c0_1, %c0_2] : memref<8x1xi32, #tpu.memory_space<vmem>>, vector<8x1xi32>
    %c0_3 = arith.constant 0 : index
    %c0_4 = arith.constant 0 : index
    %2 = vector.load %arg3[%c0_3, %c0_4] : memref<8x1xf32, #tpu.memory_space<vmem>>, vector<8x1xf32>
    %3 = tpu.iota {dimensions = array<i32: 1>} : vector<8x32xi32>
    %4 = vector.broadcast %1 : vector<8x1xi32> to vector<8x32xi32>
    %5 = arith.cmpi eq, %3, %4 : vector<8x32xi32>
    %cst = arith.constant dense<0xFF800000> : vector<8xf32>
    %6 = vector.multi_reduction <maximumf>, %0, %cst [1] : vector<8x32xf32> to vector<8xf32>
    %7 = vector.shape_cast %6 : vector<8xf32> to vector<8x1xf32>
    %8 = vector.broadcast %7 : vector<8x1xf32> to vector<8x32xf32>
    %9 = arith.subf %0, %8 : vector<8x32xf32>
    %10 = math.exp %9 : vector<8x32xf32>
    %cst_5 = arith.constant dense<0.000000e+00> : vector<8xf32>
    %11 = vector.multi_reduction <add>, %10, %cst_5 [1] : vector<8x32xf32> to vector<8xf32>
    %12 = vector.shape_cast %11 : vector<8xf32> to vector<8x1xf32>
    %13 = math.log %12 : vector<8x1xf32>
    %cst_6 = arith.constant 0.000000e+00 : f32
    %14 = vector.broadcast %cst_6 : f32 to vector<8x32xf32>
    %15 = arith.select %5, %9, %14 : vector<8x32xi1>, vector<8x32xf32>
    %cst_7 = arith.constant dense<0.000000e+00> : vector<8xf32>
    %16 = vector.multi_reduction <add>, %15, %cst_7 [1] : vector<8x32xf32> to vector<8xf32>
    %17 = vector.shape_cast %16 : vector<8xf32> to vector<8x1xf32>
    %18 = arith.subf %17, %13 : vector<8x1xf32>
    %19 = math.exp %18 : vector<8x1xf32>
    %cst_8 = arith.constant 0.000000e+00 : f32
    %20 = vector.broadcast %cst_8 : f32 to vector<8x1xf32>
    %21 = arith.subf %20, %18 : vector<8x1xf32>
    %cst_9 = arith.constant 1.000000e+00 : f32
    %22 = vector.broadcast %cst_9 : f32 to vector<8x1xf32>
    %23 = arith.subf %22, %19 : vector<8x1xf32>
    %cst_10 = arith.constant 9.99999996E-13 : f32
    %24 = vector.broadcast %cst_10 : f32 to vector<8x1xf32>
    %25 = arith.addf %23, %24 : vector<8x1xf32>
    %26 = math.log %25 : vector<8x1xf32>
    %cst_11 = arith.constant 0.000000e+00 : f32
    %27 = vector.broadcast %cst_11 : f32 to vector<8x1xf32>
    %28 = arith.subf %27, %26 : vector<8x1xf32>
    %29 = arith.mulf %2, %21 : vector<8x1xf32>
    %cst_12 = arith.constant 1.000000e+00 : f32
    %30 = vector.broadcast %cst_12 : f32 to vector<8x1xf32>
    %31 = arith.subf %30, %2 : vector<8x1xf32>
    %32 = arith.mulf %31, %28 : vector<8x1xf32>
    %33 = arith.addf %29, %32 : vector<8x1xf32>
    %c0_13 = arith.constant 0 : index
    %c0_14 = arith.constant 0 : index
    %34 = vector.load %arg4[%c0_13, %c0_14] : memref<8x1xf32, #tpu.memory_space<vmem>>, vector<8x1xf32>
    tpu.vector_store %arg4[%c0_13, %c0_14], %33 {strides = array<i32>} : memref<8x1xf32, #tpu.memory_space<vmem>>, vector<8x1xf32>,
    return
  }
  func.func @transform_0(%arg0: i32) -> (i32, i32) {
    %c0_i32 = arith.constant 0 : i32
    %c0_i32_0 = arith.constant 0 : i32
    return %arg0, %c0_i32 : i32, i32
  }
  func.func @transform_1(%arg0: i32) -> (i32, i32) {
    %c0_i32 = arith.constant 0 : i32
    %c0_i32_0 = arith.constant 0 : i32
    return %arg0, %c0_i32 : i32, i32
  }
  func.func @transform_2(%arg0: i32) -> (i32, i32) {
    %c0_i32 = arith.constant 0 : i32
    %c0_i32_0 = arith.constant 0 : i32
    return %arg0, %c0_i32 : i32, i32
  }
  func.func @transform_3(%arg0: i32) -> (i32, i32) {
    %c0_i32 = arith.constant 0 : i32
    %c0_i32_0 = arith.constant 0 : i32
    return %arg0, %c0_i32 : i32, i32
  }
}

</mosaic_0001>

<llo_original>
// kernel: inverse_cross_entropy_loss.1
$region0: #{inverse_cross_entropy_loss.1}
  #allocation0 [shape = 'u32[]', space=smem, size = 0x4, offset = 0x4, fixed_abs, tag = 'smem constant byte address 0x4 - core index']
  #allocation1 [shape = 'u32[144,128]{1,0:T(1,128)}', space=vmem, size = 0x12000, scoped, tag = 'internal scratch']
  %s0 = inlined_call_operand.vmem [shape: f32[8,32], index: 0, kind: input, shape index: {}]
  %s1 = inlined_call_operand.vmem [shape: s32[8,1], index: 1, kind: input, shape index: {}]
  %s2 = inlined_call_operand.vmem [shape: f32[8,1], index: 2, kind: input, shape index: {}]
  %s3 = inlined_call_operand.vmem [shape: f32[8,1], index: 3, kind: output, shape index: {}]
  %s4 = sld [smem:[#allocation0]]
  $region22: #{inverse_cross_entropy_loss.1} parent=0
    _
  %s6 = ssub.s32 1, %s4
  %s7 = scalar_select 0, %s6, %s4
  // Predicated region
  $region2: #{inverse_cross_entropy_loss.1} parent=0 // pred_check
    _
  $region3: #{inverse_cross_entropy_loss.1} parent=0 // pred_check_branch
    %9 = sbr.rel (0) target = $region5
  $region4: #{inverse_cross_entropy_loss.1} parent=0 // pred_region
    _
  $region5: #{inverse_cross_entropy_loss.1} parent=0 // pred_fallthru
    _
  // Predicated region
  $region6: #{inverse_cross_entropy_loss.1} parent=0 // pred_check
    _
  $region7: #{inverse_cross_entropy_loss.1} parent=0 // pred_check_branch
    %11 = sbr.rel (0) target = $region9
  $region8: #{inverse_cross_entropy_loss.1} parent=0 // pred_region
    _
  $region9: #{inverse_cross_entropy_loss.1} parent=0 // pred_fallthru
    _
  // Predicated region
  $region10: #{inverse_cross_entropy_loss.1} parent=0 // pred_check
    _
  $region11: #{inverse_cross_entropy_loss.1} parent=0 // pred_check_branch
    %13 = sbr.rel (0) target = $region13
  $region12: #{inverse_cross_entropy_loss.1} parent=0 // pred_region
    _
  $region13: #{inverse_cross_entropy_loss.1} parent=0 // pred_fallthru
    _
  %v14 = vld [vmem:[%s0] sm:$0xff]
  %v15 = vld [vmem:[%s1] sm:$0xff]
  %v16 = vld [vmem:[%s2] sm:$0xff]
  %v17 = vlaneseq
  %v18 = vand.u32 %v17, 127
  %19 = vset.pattern.permute.xlu0 0
  %20 = vperm.xlu0 %19, %v15
  %v21 = vpop.permute.xlu0 %20
  %vm22 = vcmp.eq.s32.totalorder %v18, %v21
  %vm23 = vcmask 261120
  %v24 = vsel %vm23, %v14, -inf
  %25 = vmax.xlane.f32.xlu0 %v24
  %v26 = vpop.xlane.xlu0 %25
  %v27 = vsub.f32 %v14, %v26
  %v28 = vmul.f32 %v27, 1.442695
  %v29 = vpow.pop %v28
  %v30 = vsel %vm23, %v29, 0.0
  %31 = vadd.xlane.f32.xlu0 %v30
  %v32 = vpop.xlane.xlu0 %31
  %v33 = vlog2.pop %v32
  %v34 = vmul.f32 %v33, 0.6931472
  %v35 = vsel %vm22, %v27, 0.0
  %v36 = vsel %vm23, %v35, 0.0
  %37 = vadd.xlane.f32.xlu0 %v36
  %v38 = vpop.xlane.xlu0 %37
  %v39 = vsub.f32 %v38, %v34
  %v40 = vmul.f32 %v39, 1.442695
  %v41 = vpow.pop %v40
  %v42 = vsub.f32 0.0, %v39
  %v43 = vsub.f32 1.0, %v41
  %v44 = vadd.f32 %v43, 1e-12
  %v45 = vlog2.pop %v44
  %v46 = vmul.f32 %v45, 0.6931472
  %v47 = vsub.f32 0.0, %v46
  %v48 = vmul.f32 %v16, %v42
  %v49 = vsub.f32 1.0, %v16
  %v50 = vmul.f32 %v49, %v47
  %v51 = vadd.f32 %v48, %v50
  %vm52 = vcmask 7168
  %53 = vst.msk [vmem:[%s3] sm:$0xff] %vm52, %v51
  // Predicated region
  $region14: #{inverse_cross_entropy_loss.1} parent=0 // pred_check
    _
  $region15: #{inverse_cross_entropy_loss.1} parent=0 // pred_check_branch
    %55 = sbr.rel (0) target = $region17
  $region16: #{inverse_cross_entropy_loss.1} parent=0 // pred_region
    _
  $region17: #{inverse_cross_entropy_loss.1} parent=0 // pred_fallthru
    _
  // Predicated region
  $region18: #{inverse_cross_entropy_loss.1} parent=0 // pred_check
    _
  $region19: #{inverse_cross_entropy_loss.1} parent=0 // pred_check_branch
    %57 = sbr.rel (0) target = $region21
  $region20: #{inverse_cross_entropy_loss.1} parent=0 // pred_region
    _
  $region21: #{inverse_cross_entropy_loss.1} parent=0 // pred_fallthru
    _

</llo_original>
